<compile_context>
chip_gen: v6e
topology: v6e:2x2x1
jax: 0.10.0
libtpu: 0.0.40
codegen_flags: <defaults>
</compile_context>

<pallas_src>
import math

import jax
import jax.numpy as jnp
from jax.experimental import pallas as pl
from jax.experimental.pallas import tpu as pltpu


def _round_up(x, m):
    return ((x + m - 1) // m) * m


# ----------------------------------------------------------------------- kernel body


def _rbf_forward_kernel(x_ref, basis_t_ref, o_ref):
    # x_ref:       (tile_b, K8)   coefficients for this batch tile
    # basis_t_ref: (K8, S)        basis^T, grid-invariant (kept resident in VMEM)
    # o_ref:       (tile_b, S)
    o_ref[...] = jnp.dot(
        x_ref[...], basis_t_ref[...], preferred_element_type=jnp.float32
    ).astype(o_ref.dtype)


# -------------------------------------------------------------- basis precomputation


def make_rbf_basis(size, strides, width=1.0, dtype=jnp.float32):
    """(size, n_basis) RBF basis, matching the PyTorch __init__."""
    n_mus = int(math.ceil(size / strides))
    if n_mus < 2:
        # PyTorch would raise on mus[1]; make the failure explicit instead of NaNs.
        raise ValueError("size/strides must yield at least 2 basis centers")
    x = jnp.arange(size, dtype=jnp.float32)
    mus = jnp.linspace(0.0, float(size - 1), n_mus)
    s = mus[1] - mus[0]
    w = s * width
    basis = jnp.exp(-jnp.square((x[:, None] - mus[None, :]) / w)) / w
    basis = basis / jnp.sum(basis, axis=1, keepdims=True)
    return basis.astype(dtype)


def prepare_rbf_basis_t(basis, matmul_dtype=jnp.bfloat16):
    """One-time prep of the constant MXU operand: basis^T with the contraction dim
    padded to a multiple of 8 sublanes (zero rows contribute nothing).  Do this once
    (like PyTorch's registered buffer) and reuse it for every forward call."""
    S, K = basis.shape
    K8 = _round_up(K, 8)
    bt = jnp.zeros((K8, S), matmul_dtype)
    bt = bt.at[:K, :].set(basis.T.astype(matmul_dtype))
    return bt


# ----------------------------------------------------------------------- forward pass


def rbf1d_forward_pallas(inp, basis_t, *, out_dtype=None, tile_b=None):
    """forward(input): (B, n_basis) -> (B, size) via out = input @ basis^T.

    basis_t: prepared with prepare_rbf_basis_t (shape (K8, size)); its dtype is the
             MXU operand dtype (bf16 by default).  Accumulation is always f32.
    out_dtype: output dtype (default: input dtype).
    tile_b: optional max batch-tile rows; otherwise derived from VMEM capacity.
    """
    B, K = inp.shape
    K8, S = basis_t.shape
    if K8 != _round_up(K, 8):
        raise ValueError("basis_t must come from prepare_rbf_basis_t for this input")
    matmul_dtype = basis_t.dtype
    out_dtype = inp.dtype if out_dtype is None else jnp.dtype(out_dtype)
    if B == 0:
        return jnp.zeros((0, S), out_dtype)

    itemsize_in = jnp.dtype(matmul_dtype).itemsize
    itemsize_out = jnp.dtype(out_dtype).itemsize
    S_lane = _round_up(S, 128)            # VMEM lane padding of resident tiles
    K_lane = _round_up(K8, 128)
    basis_vmem = K8 * S_lane * itemsize_in

    # ---- per-generation tile sizing under an explicit VMEM budget -----------------
    try:
        vmem_cap = int(pltpu.get_tpu_info().vmem_capacity_bytes)
    except Exception:  # fall back to the smallest capacity (v7x per-core: 64 MiB)
        vmem_cap = 64 << 20
    if tile_b is None:
        tile_b_max = 1024 if vmem_cap >= (100 << 20) else 512   # v5e/v6e vs v7x
    else:
        tile_b_max = max(8, _round_up(int(tile_b), 8))
    budget = max(4 << 20, min(vmem_cap // 2, 44 << 20) - 2 * basis_vmem)
    per_row = 2 * (K_lane * itemsize_in + S_lane * itemsize_out)  # double-buffered x+out
    tile_b_max = max(8, min(tile_b_max, (budget // per_row) // 8 * 8))

    # ---- balanced batch tiling; >=2 (even) steps so "parallel" feeds both v7x TCs --
    B8 = _round_up(B, 8)
    min_steps = 2 if B8 >= 16 else 1
    n_tiles = max(pl.cdiv(B8, tile_b_max), min_steps)
    if n_tiles > 1 and n_tiles % 2:
        n_tiles += 1
    tile_rows = _round_up(pl.cdiv(B8, n_tiles), 8)
    n_tiles = pl.cdiv(B8, tile_rows)
    B_pad = n_tiles * tile_rows

    # ---- input: cast/pad (K -> K8, B -> B_pad) only when actually required ---------
    if B_pad != B or K8 != K or inp.dtype != jnp.dtype(matmul_dtype):
        x_p = jnp.zeros((B_pad, K8), matmul_dtype).at[:B, :K].set(
            inp.astype(matmul_dtype))
    else:
        x_p = inp

    vmem_limit = int(min(
        48 << 20,
        max(32 << 20, tile_rows * per_row + 2 * basis_vmem + (4 << 20))))

    flops = 2 * B * K * S                              # true dims, not padded
    bytes_accessed = (B_pad * K8 * itemsize_in
                      + K8 * S * itemsize_in
                      + B_pad * S * itemsize_out)

    def _build(basis_buffering):
        extra = {} if basis_buffering is None else {"pipeline_mode": basis_buffering}
        return pl.pallas_call(
            _rbf_forward_kernel,
            out_shape=jax.ShapeDtypeStruct((B_pad, S), out_dtype),
            grid_spec=pltpu.PrefetchScalarGridSpec(
                num_scalar_prefetch=0,
                grid=(n_tiles,),
                in_specs=[
                    pl.BlockSpec((tile_rows, K8), lambda i: (i, 0)),      # x batch tile
                    pl.BlockSpec((K8, S), lambda i: (0, 0), **extra),     # basis^T (invariant)
                ],
                out_specs=pl.BlockSpec((tile_rows, S), lambda i: (i, 0)),
            ),
            compiler_params=pltpu.CompilerParams(
                dimension_semantics=("parallel",),
                vmem_limit_bytes=vmem_limit,
            ),
            cost_estimate=pl.CostEstimate(
                flops=flops, transcendentals=0, bytes_accessed=bytes_accessed),
        )

    try:
        # Invariant operand never changes block index -> single-buffer it.
        out_p = _build(pl.Buffered(1))(x_p, basis_t)
    except Exception:
        # Fallback: default (double) buffering if Buffered(1) is rejected.
        out_p = _build(None)(x_p, basis_t)

    return out_p if B_pad == B else out_p[:B]


def rbf1d_forward_reference(inp, basis):
    # torch.sum(input[:, None, :] * basis[None, ...], -1)
    return jnp.sum(inp[:, None, :] * basis[None, ...], axis=-1)


if __name__ == "__main__":
    # Small module hyperparameters consistent with the forward pass.
    size = 16
    strides = 4
    width = 1.0
    batch = 8

    basis = make_rbf_basis(size, strides, width)      # (size, n_basis) = (16, 4)
    n_basis = basis.shape[1]

    key = jax.random.PRNGKey(0)
    inp = jax.random.normal(key, (batch, n_basis), jnp.float32)

    ref = rbf1d_forward_reference(inp, basis)

    # f32-operand path: exact check against the reference.
    basis_t_f32 = prepare_rbf_basis_t(basis, jnp.float32)
    out_f32 = jax.block_until_ready(rbf1d_forward_pallas(inp, basis_t_f32))
    assert out_f32.shape == (batch, size)
    assert jnp.allclose(out_f32, ref, atol=1e-5, rtol=1e-5), "f32 Pallas kernel mismatch"

    # Default bf16-operand path (f32 accumulation): expected bf16-level precision.
    basis_t_bf16 = prepare_rbf_basis_t(basis)         # bf16 by default
    out_bf16 = jax.block_until_ready(rbf1d_forward_pallas(inp, basis_t_bf16))
    assert out_bf16.shape == (batch, size)
    assert jnp.allclose(out_bf16, ref, atol=2e-2, rtol=2e-2), "bf16 Pallas kernel mismatch"

    print("KERNEL_OK")
</pallas_src>

<mosaic_0001>
module attributes {stable_mosaic.version = 11 : i64} {
  func.func @_rbf_forward_kernel(%arg0: i32, %arg1: memref<8x8xf32, #tpu.memory_space<vmem>>, %arg2: memref<8x16xf32, #tpu.memory_space<vmem>>, %arg3: memref<8x16xf32, #tpu.memory_space<vmem>>) attributes {dimension_semantics = [#tpu.dimension_semantics<parallel>], iteration_bounds = array<i64: 1>, scalar_prefetch = 0 : i64, scratch_operands = 0 : i64, tpu.core_type = #tpu.core_type<tc>, window_params = [{transform_indices = @transform_0, window_bounds = array<i64: 8, 8>}, {pipeline_mode = #tpu.pipeline_mode<synchronous>, transform_indices = @transform_1, window_bounds = array<i64: 8, 16>}, {transform_indices = @transform_2, window_bounds = array<i64: 8, 16>}]} {
    %c0 = arith.constant 0 : index
    %c0_0 = arith.constant 0 : index
    %0 = vector.load %arg1[%c0, %c0_0] : memref<8x8xf32, #tpu.memory_space<vmem>>, vector<8x8xf32>
    %c0_1 = arith.constant 0 : index
    %c0_2 = arith.constant 0 : index
    %1 = vector.load %arg2[%c0_1, %c0_2] : memref<8x16xf32, #tpu.memory_space<vmem>>, vector<8x16xf32>
    %cst = arith.constant dense<0.000000e+00> : vector<8x16xf32>
    %2 = tpu.matmul %0, %1, %cst {dimension_numbers = #tpu.dot_dimension_numbers<[1], [0], [0], [1], [0, 0, 1, 1], [], []>} : vector<8x8xf32>, vector<8x16xf32>, vector<8x16xf32> -> vector<8x16xf32>
    %c0_3 = arith.constant 0 : index
    %c0_4 = arith.constant 0 : index
    %3 = vector.load %arg3[%c0_3, %c0_4] : memref<8x16xf32, #tpu.memory_space<vmem>>, vector<8x16xf32>
    tpu.vector_store %arg3[%c0_3, %c0_4], %2 {strides = array<i32>} : memref<8x16xf32, #tpu.memory_space<vmem>>, vector<8x16xf32>,
    return
  }
  func.func @transform_0(%arg0: i32) -> (i32, i32) {
    %c0_i32 = arith.constant 0 : i32
    %c0_i32_0 = arith.constant 0 : i32
    return %arg0, %c0_i32 : i32, i32
  }
  func.func @transform_1(%arg0: i32) -> (i32, i32) {
    %c0_i32 = arith.constant 0 : i32
    %c0_i32_0 = arith.constant 0 : i32
    %c0_i32_1 = arith.constant 0 : i32
    return %c0_i32, %c0_i32_0 : i32, i32
  }
  func.func @transform_2(%arg0: i32) -> (i32, i32) {
    %c0_i32 = arith.constant 0 : i32
    %c0_i32_0 = arith.constant 0 : i32
    return %arg0, %c0_i32 : i32, i32
  }
}

module attributes {stable_mosaic.version = 11 : i64} {
  func.func @_rbf_forward_kernel(%arg0: i32, %arg1: memref<8x8xf32, #tpu.memory_space<vmem>>, %arg2: memref<8x16xf32, #tpu.memory_space<vmem>>, %arg3: memref<8x16xf32, #tpu.memory_space<vmem>>) attributes {dimension_semantics = [#tpu.dimension_semantics<parallel>], iteration_bounds = array<i64: 1>, scalar_prefetch = 0 : i64, scratch_operands = 0 : i64, tpu.core_type = #tpu.core_type<tc>, window_params = [{transform_indices = @transform_0, window_bounds = array<i64: 8, 8>}, {pipeline_mode = #tpu.pipeline_mode<synchronous>, transform_indices = @transform_1, window_bounds = array<i64: 8, 16>}, {transform_indices = @transform_2, window_bounds = array<i64: 8, 16>}]} {
    %c0 = arith.constant 0 : index
    %c0_0 = arith.constant 0 : index
    %0 = vector.load %arg1[%c0, %c0_0] : memref<8x8xf32, #tpu.memory_space<vmem>>, vector<8x8xf32>
    %c0_1 = arith.constant 0 : index
    %c0_2 = arith.constant 0 : index
    %1 = vector.load %arg2[%c0_1, %c0_2] : memref<8x16xf32, #tpu.memory_space<vmem>>, vector<8x16xf32>
    %cst = arith.constant dense<0.000000e+00> : vector<8x16xf32>
    %2 = tpu.matmul %0, %1, %cst {dimension_numbers = #tpu.dot_dimension_numbers<[1], [0], [0], [1], [0, 0, 1, 1], [], []>} : vector<8x8xf32>, vector<8x16xf32>, vector<8x16xf32> -> vector<8x16xf32>
    %c0_3 = arith.constant 0 : index
    %c0_4 = arith.constant 0 : index
    %3 = vector.load %arg3[%c0_3, %c0_4] : memref<8x16xf32, #tpu.memory_space<vmem>>, vector<8x16xf32>
    tpu.vector_store %arg3[%c0_3, %c0_4], %2 {strides = array<i32>} : memref<8x16xf32, #tpu.memory_space<vmem>>, vector<8x16xf32>,
    return
  }
  func.func @transform_0(%arg0: i32) -> (i32, i32) {
    %c0_i32 = arith.constant 0 : i32
    %c0_i32_0 = arith.constant 0 : i32
    return %arg0, %c0_i32 : i32, i32
  }
  func.func @transform_1(%arg0: i32) -> (i32, i32) {
    %c0_i32 = arith.constant 0 : i32
    %c0_i32_0 = arith.constant 0 : i32
    %c0_i32_1 = arith.constant 0 : i32
    return %c0_i32, %c0_i32_0 : i32, i32
  }
  func.func @transform_2(%arg0: i32) -> (i32, i32) {
    %c0_i32 = arith.constant 0 : i32
    %c0_i32_0 = arith.constant 0 : i32
    return %arg0, %c0_i32 : i32, i32
  }
}

</mosaic_0001>

<llo_original>
// kernel: tpu_custom_call.1
$region0: #{tpu_custom_call.1}
  #allocation0 [shape = 'u32[]', space=smem, size = 0x4, offset = 0x4, fixed_abs, tag = 'smem constant byte address 0x4 - core index']
  #allocation1 [shape = 'u32[144,128]{1,0:T(1,128)}', space=vmem, size = 0x12000, scoped, tag = 'internal scratch']
  %s0 = inlined_call_operand.hbm [shape: f32[8,8], index: 0, kind: input, shape index: {}]
  %s1 = inlined_call_operand.hbm [shape: f32[8,16], index: 1, kind: input, shape index: {}]
  %s2 = inlined_call_operand.hbm [shape: f32[8,16], index: 2, kind: output, shape index: {}]
  %s3 = sld [smem:[#allocation0]]
  $region26: #{tpu_custom_call.1} parent=0
    _
  %s5 = ssub.s32 1, %s3
  %s6 = scalar_select 0, %s5, %s3
  $region1: #{tpu_custom_call.1} parent=0
    #allocation2 [shape = 'u8[4096]{0}', space=vmem, size = 0x1000, scoped, tag = 'input window, operand 0, single buffered']
    #allocation3 [shape = 's32[1]{0}', space=sflag, size = 0x4, scoped, tag = 'scoped memory for tpu_custom_call.1']
    #allocation4 [shape = 's32[1]{0}', space=sflag, size = 0x4, scoped, tag = 'scoped memory for tpu_custom_call.1']
    #allocation5 [shape = 'u8[4096]{0}', space=vmem, size = 0x1000, scoped, tag = 'input window, operand 1, single buffered']
    #allocation6 [shape = 's32[1]{0}', space=sflag, size = 0x4, scoped, tag = 'scoped memory for tpu_custom_call.1']
    #allocation7 [shape = 'u8[4096]{0}', space=vmem, size = 0x1000, scoped, tag = 'output window, operand 0, single buffered']
    %7 = vsyncpa [#allocation3], 0
    %8 = vsyncpa [#allocation6], 0
    %9 = vsyncpa [#allocation4], 0
    // Predicated region
    $region2: #{tpu_custom_call.1} parent=1 // pred_check
      _
    $region3: #{tpu_custom_call.1} parent=1 // pred_check_branch
      %11 = sbr.rel (0) target = $region5
    $region4: #{tpu_custom_call.1} parent=1 // pred_region
      %s13 = ssub.s32 128, 128
      %14 = vsyncadd [#allocation3], %s13
      %s16 = sshll.u32 [#allocation2], 4
      %s17 = int_to_ptr.vmem [resolvable:$true] %s16
      %19 = dma.hbm_to_vmem [thread:$0]  %s0, 128, %s17, [#allocation3]
    $region5: #{tpu_custom_call.1} parent=1 // pred_fallthru
      _
    // Predicated region
    $region6: #{tpu_custom_call.1} parent=1 // pred_check
      _
    $region7: #{tpu_custom_call.1} parent=1 // pred_check_branch
      %21 = sbr.rel (0) target = $region9
    $region8: #{tpu_custom_call.1} parent=1 // pred_region
      %s23 = ssub.s32 128, 128
      %24 = vsyncadd [#allocation6], %s23
      %s26 = sshll.u32 [#allocation5], 4
      %s27 = int_to_ptr.vmem [resolvable:$true] %s26
      %29 = dma.hbm_to_vmem [thread:$0]  %s1, 128, %s27, [#allocation6]
    $region9: #{tpu_custom_call.1} parent=1 // pred_fallthru
      _
    // Predicated region
    $region10: #{tpu_custom_call.1} parent=1 // pred_check
      _
    $region11: #{tpu_custom_call.1} parent=1 // pred_check_branch
      %31 = sbr.rel (0) target = $region13
    $region12: #{tpu_custom_call.1} parent=1 // pred_region
      %32 = dma.done [#allocation3], 128
    $region13: #{tpu_custom_call.1} parent=1 // pred_fallthru
      _
    // Predicated region
    $region14: #{tpu_custom_call.1} parent=1 // pred_check
      _
    $region15: #{tpu_custom_call.1} parent=1 // pred_check_branch
      %34 = sbr.rel (0) target = $region17
    $region16: #{tpu_custom_call.1} parent=1 // pred_region
      %35 = dma.done [#allocation6], 128
    $region17: #{tpu_custom_call.1} parent=1 // pred_fallthru
      _
    %v36 = vld [vmem:[#allocation2] sm:$0xff]
    %v37 = vld [vmem:[#allocation5] sm:$0xff]
    %vm38 = vcmask 64512
    %v40 = vsel %vm38, %v36, 0
    %42 = vmatprep.subr.mxu0 0.0
    %43 = vmatpush1.msra.mxu0 0.0
    %44 = vmatprep.subr.mxu0 0.0
    %45 = vmatpush1.msra.mxu0 0.0
    %46 = vmatprep.subr.mxu0 0.0
    %47 = vmatpush1.msra.mxu0 0.0
    %48 = vmatprep.subr.mxu0 0.0
    %49 = vmatpush1.msra.mxu0 0.0
    %50 = vmatprep.subr.mxu0 0.0
    %51 = vmatpush1.msra.mxu0 0.0
    %52 = vmatprep.subr.mxu0 0.0
    %53 = vmatpush1.msra.mxu0 0.0
    %54 = vmatprep.subr.mxu0 0.0
    %55 = vmatpush1.msra.mxu0 0.0
    %56 = vmatprep.subr.mxu0 0.0
    %57 = vmatpush1.msra.mxu0 0.0
    %58 = vmatprep.subr.mxu0 0.0
    %59 = vmatpush1.msra.mxu0 0.0
    %60 = vmatprep.subr.mxu0 0.0
    %61 = vmatpush1.msra.mxu0 0.0
    %62 = vmatprep.subr.mxu0 0.0
    %63 = vmatpush1.msra.mxu0 0.0
    %64 = vmatprep.subr.mxu0 0.0
    %65 = vmatpush1.msra.mxu0 0.0
    %66 = vmatprep.subr.mxu0 0.0
    %67 = vmatpush1.msra.mxu0 0.0
    %68 = vmatprep.subr.mxu0 0.0
    %69 = vmatpush1.msra.mxu0 0.0
    %70 = vmatprep.subr.mxu0 0.0
    %71 = vmatpush1.msra.mxu0 0.0
    %72 = vmatprep.subr.mxu0 0.0
    %73 = vmatpush1.msra.mxu0 %v37
    %74 = vmatprep.subr.mxu0 0.0
    %75 = vmatpush2.msra.mxu0 0.0
    %76 = vmatprep.subr.mxu0 0.0
    %77 = vmatpush2.msra.mxu0 0.0
    %78 = vmatprep.subr.mxu0 0.0
    %79 = vmatpush2.msra.mxu0 0.0
    %80 = vmatprep.subr.mxu0 0.0
    %81 = vmatpush2.msra.mxu0 0.0
    %82 = vmatprep.subr.mxu0 0.0
    %83 = vmatpush2.msra.mxu0 0.0
    %84 = vmatprep.subr.mxu0 0.0
    %85 = vmatpush2.msra.mxu0 0.0
    %86 = vmatprep.subr.mxu0 0.0
    %87 = vmatpush2.msra.mxu0 0.0
    %88 = vmatprep.subr.mxu0 0.0
    %89 = vmatpush2.msra.mxu0 0.0
    %90 = vmatprep.subr.mxu0 0.0
    %91 = vmatpush2.msra.mxu0 0.0
    %92 = vmatprep.subr.mxu0 0.0
    %93 = vmatpush2.msra.mxu0 0.0
    %94 = vmatprep.subr.mxu0 0.0
    %95 = vmatpush2.msra.mxu0 0.0
    %96 = vmatprep.subr.mxu0 0.0
    %97 = vmatpush2.msra.mxu0 0.0
    %98 = vmatprep.subr.mxu0 0.0
    %99 = vmatpush2.msra.mxu0 0.0
    %100 = vmatprep.subr.mxu0 0.0
    %101 = vmatpush2.msra.mxu0 0.0
    %102 = vmatprep.subr.mxu0 0.0
    %103 = vmatpush2.msra.mxu0 0.0
    %104 = vmatprep.subr.mxu0 0.0
    %105 = vmatpush2.msra.mxu0 0.0
    %106 = vmatprep.mubr.f32.mxu0 0.0
    %107 = vmatmul.mubr.f32.gmra.mxu0 %v40
    %v108 = vpop.f32.mrf.mxu0
    %v109 = vadd.f32 0.0, %v108
    %v110 = vpop.f32.mrf.mxu0
    %111 = vdwg.mxu0
    %vm112 = vcmask 130048
    %113 = vst.msk [vmem:[#allocation7] sm:$0xff] %vm112, %v109
    // Predicated region
    $region18: #{tpu_custom_call.1} parent=1 // pred_check
      _
    $region19: #{tpu_custom_call.1} parent=1 // pred_check_branch
      %115 = sbr.rel (0) target = $region21
    $region20: #{tpu_custom_call.1} parent=1 // pred_region
      %s117 = ssub.s32 128, 128
      %118 = vsyncadd [#allocation4], %s117
      %s120 = sshll.u32 [#allocation7], 4
      %s121 = int_to_ptr.vmem [resolvable:$true] %s120
      %123 = dma.vmem_to_hbm [thread:$0]  %s121, 128, %s2, [#allocation4]
    $region21: #{tpu_custom_call.1} parent=1 // pred_fallthru
      _
    // Predicated region
    $region22: #{tpu_custom_call.1} parent=1 // pred_check
      _
    $region23: #{tpu_custom_call.1} parent=1 // pred_check_branch
      %125 = sbr.rel (0) target = $region25
    $region24: #{tpu_custom_call.1} parent=1 // pred_region
      %126 = dma.done [#allocation4], 128
    $region25: #{tpu_custom_call.1} parent=1 // pred_fallthru
      _
    %127 = vsyncpa [#allocation3], 1
    %128 = vsyncpa [#allocation6], 1
    %129 = vsyncpa [#allocation4], 1

// kernel: tpu_custom_call.1
$region0: #{tpu_custom_call.1}
  #allocation0 [shape = 'u32[]', space=smem, size = 0x4, offset = 0x4, fixed_abs, tag = 'smem constant byte address 0x4 - core index']
  #allocation1 [shape = 'u32[144,128]{1,0:T(1,128)}', space=vmem, size = 0x12000, scoped, tag = 'internal scratch']
  %s0 = inlined_call_operand.hbm [shape: f32[8,8], index: 0, kind: input, shape index: {}]
  %s1 = inlined_call_operand.hbm [shape: f32[8,16], index: 1, kind: input, shape index: {}]
  %s2 = inlined_call_operand.hbm [shape: f32[8,16], index: 2, kind: output, shape index: {}]
  %s3 = sld [smem:[#allocation0]]
  $region26: #{tpu_custom_call.1} parent=0
    _
  %s5 = ssub.s32 1, %s3
  %s6 = scalar_select 0, %s5, %s3
  $region1: #{tpu_custom_call.1} parent=0
    #allocation2 [shape = 'u8[4096]{0}', space=vmem, size = 0x1000, scoped, tag = 'input window, operand 0, single buffered']
    #allocation3 [shape = 's32[1]{0}', space=sflag, size = 0x4, scoped, tag = 'scoped memory for tpu_custom_call.1']
    #allocation4 [shape = 's32[1]{0}', space=sflag, size = 0x4, scoped, tag = 'scoped memory for tpu_custom_call.1']
    #allocation5 [shape = 'u8[4096]{0}', space=vmem, size = 0x1000, scoped, tag = 'input window, operand 1, single buffered']
    #allocation6 [shape = 's32[1]{0}', space=sflag, size = 0x4, scoped, tag = 'scoped memory for tpu_custom_call.1']
    #allocation7 [shape = 'u8[4096]{0}', space=vmem, size = 0x1000, scoped, tag = 'output window, operand 0, single buffered']
    %7 = vsyncpa [#allocation3], 0
    %8 = vsyncpa [#allocation6], 0
    %9 = vsyncpa [#allocation4], 0
    // Predicated region
    $region2: #{tpu_custom_call.1} parent=1 // pred_check
      _
    $region3: #{tpu_custom_call.1} parent=1 // pred_check_branch
      %11 = sbr.rel (0) target = $region5
    $region4: #{tpu_custom_call.1} parent=1 // pred_region
      %s13 = ssub.s32 128, 128
      %14 = vsyncadd [#allocation3], %s13
      %s16 = sshll.u32 [#allocation2], 4
      %s17 = int_to_ptr.vmem [resolvable:$true] %s16
      %19 = dma.hbm_to_vmem [thread:$0]  %s0, 128, %s17, [#allocation3]
    $region5: #{tpu_custom_call.1} parent=1 // pred_fallthru
      _
    // Predicated region
    $region6: #{tpu_custom_call.1} parent=1 // pred_check
      _
    $region7: #{tpu_custom_call.1} parent=1 // pred_check_branch
      %21 = sbr.rel (0) target = $region9
    $region8: #{tpu_custom_call.1} parent=1 // pred_region
      %s23 = ssub.s32 128, 128
      %24 = vsyncadd [#allocation6], %s23
      %s26 = sshll.u32 [#allocation5], 4
      %s27 = int_to_ptr.vmem [resolvable:$true] %s26
      %29 = dma.hbm_to_vmem [thread:$0]  %s1, 128, %s27, [#allocation6]
    $region9: #{tpu_custom_call.1} parent=1 // pred_fallthru
      _
    // Predicated region
    $region10: #{tpu_custom_call.1} parent=1 // pred_check
      _
    $region11: #{tpu_custom_call.1} parent=1 // pred_check_branch
      %31 = sbr.rel (0) target = $region13
    $region12: #{tpu_custom_call.1} parent=1 // pred_region
      %32 = dma.done [#allocation3], 128
    $region13: #{tpu_custom_call.1} parent=1 // pred_fallthru
      _
    // Predicated region
    $region14: #{tpu_custom_call.1} parent=1 // pred_check
      _
    $region15: #{tpu_custom_call.1} parent=1 // pred_check_branch
      %34 = sbr.rel (0) target = $region17
    $region16: #{tpu_custom_call.1} parent=1 // pred_region
      %35 = dma.done [#allocation6], 128
    $region17: #{tpu_custom_call.1} parent=1 // pred_fallthru
      _
    %v36 = vld [vmem:[#allocation2] sm:$0xff]
    %v37 = vld [vmem:[#allocation5] sm:$0xff]
    %vm38 = vcmask 64512
    %v40 = vsel %vm38, %v36, 0
    %42 = vmatprep.subr.mxu0 0.0
    %43 = vmatpush1.msra.mxu0 0.0
    %44 = vmatprep.subr.mxu0 0.0
    %45 = vmatpush1.msra.mxu0 0.0
    %46 = vmatprep.subr.mxu0 0.0
    %47 = vmatpush1.msra.mxu0 0.0
    %48 = vmatprep.subr.mxu0 0.0
    %49 = vmatpush1.msra.mxu0 0.0
    %50 = vmatprep.subr.mxu0 0.0
    %51 = vmatpush1.msra.mxu0 0.0
    %52 = vmatprep.subr.mxu0 0.0
    %53 = vmatpush1.msra.mxu0 0.0
    %54 = vmatprep.subr.mxu0 0.0
    %55 = vmatpush1.msra.mxu0 0.0
    %56 = vmatprep.subr.mxu0 0.0
    %57 = vmatpush1.msra.mxu0 0.0
    %58 = vmatprep.subr.mxu0 0.0
    %59 = vmatpush1.msra.mxu0 0.0
    %60 = vmatprep.subr.mxu0 0.0
    %61 = vmatpush1.msra.mxu0 0.0
    %62 = vmatprep.subr.mxu0 0.0
    %63 = vmatpush1.msra.mxu0 0.0
    %64 = vmatprep.subr.mxu0 0.0
    %65 = vmatpush1.msra.mxu0 0.0
    %66 = vmatprep.subr.mxu0 0.0
    %67 = vmatpush1.msra.mxu0 0.0
    %68 = vmatprep.subr.mxu0 0.0
    %69 = vmatpush1.msra.mxu0 0.0
    %70 = vmatprep.subr.mxu0 0.0
    %71 = vmatpush1.msra.mxu0 0.0
    %72 = vmatprep.subr.mxu0 0.0
    %73 = vmatpush1.msra.mxu0 %v37
    %74 = vmatprep.subr.mxu0 0.0
    %75 = vmatpush2.msra.mxu0 0.0
    %76 = vmatprep.subr.mxu0 0.0
    %77 = vmatpush2.msra.mxu0 0.0
    %78 = vmatprep.subr.mxu0 0.0
    %79 = vmatpush2.msra.mxu0 0.0
    %80 = vmatprep.subr.mxu0 0.0
    %81 = vmatpush2.msra.mxu0 0.0
    %82 = vmatprep.subr.mxu0 0.0
    %83 = vmatpush2.msra.mxu0 0.0
    %84 = vmatprep.subr.mxu0 0.0
    %85 = vmatpush2.msra.mxu0 0.0
    %86 = vmatprep.subr.mxu0 0.0
    %87 = vmatpush2.msra.mxu0 0.0
    %88 = vmatprep.subr.mxu0 0.0
    %89 = vmatpush2.msra.mxu0 0.0
    %90 = vmatprep.subr.mxu0 0.0
    %91 = vmatpush2.msra.mxu0 0.0
    %92 = vmatprep.subr.mxu0 0.0
    %93 = vmatpush2.msra.mxu0 0.0
    %94 = vmatprep.subr.mxu0 0.0
    %95 = vmatpush2.msra.mxu0 0.0
    %96 = vmatprep.subr.mxu0 0.0
    %97 = vmatpush2.msra.mxu0 0.0
    %98 = vmatprep.subr.mxu0 0.0
    %99 = vmatpush2.msra.mxu0 0.0
    %100 = vmatprep.subr.mxu0 0.0
    %101 = vmatpush2.msra.mxu0 0.0
    %102 = vmatprep.subr.mxu0 0.0
    %103 = vmatpush2.msra.mxu0 0.0
    %104 = vmatprep.subr.mxu0 0.0
    %105 = vmatpush2.msra.mxu0 0.0
    %106 = vmatprep.mubr.f32.mxu0 0.0
    %107 = vmatmul.mubr.f32.gmra.mxu0 %v40
    %v108 = vpop.f32.mrf.mxu0
    %v109 = vadd.f32 0.0, %v108
    %v110 = vpop.f32.mrf.mxu0
    %111 = vdwg.mxu0
    %vm112 = vcmask 130048
    %113 = vst.msk [vmem:[#allocation7] sm:$0xff] %vm112, %v109
    // Predicated region
    $region18: #{tpu_custom_call.1} parent=1 // pred_check
      _
    $region19: #{tpu_custom_call.1} parent=1 // pred_check_branch
      %115 = sbr.rel (0) target = $region21
    $region20: #{tpu_custom_call.1} parent=1 // pred_region
      %s117 = ssub.s32 128, 128
      %118 = vsyncadd [#allocation4], %s117
      %s120 = sshll.u32 [#allocation7], 4
      %s121 = int_to_ptr.vmem [resolvable:$true] %s120
      %123 = dma.vmem_to_hbm [thread:$0]  %s121, 128, %s2, [#allocation4]
    $region21: #{tpu_custom_call.1} parent=1 // pred_fallthru
      _
    // Predicated region
    $region22: #{tpu_custom_call.1} parent=1 // pred_check
      _
    $region23: #{tpu_custom_call.1} parent=1 // pred_check_branch
      %125 = sbr.rel (0) target = $region25
    $region24: #{tpu_custom_call.1} parent=1 // pred_region
      %126 = dma.done [#allocation4], 128
    $region25: #{tpu_custom_call.1} parent=1 // pred_fallthru
      _
    %127 = vsyncpa [#allocation3], 1
    %128 = vsyncpa [#allocation6], 1
    %129 = vsyncpa [#allocation4], 1

</llo_original>
